<compile_context>
chip_gen: v6e
topology: v6e:2x2x1
jax: 0.10.0
libtpu: 0.0.40
codegen_flags: <defaults>
</compile_context>

<pallas_src>
import math

import jax
import jax.numpy as jnp
from jax.experimental import pallas as pl
from jax.experimental.pallas import tpu as pltpu

_LANE = 128
_TARGET_BLOCK_BYTES = 2 * 1024 * 1024   # ~2 MiB block -> roofline regime, VMEM-safe everywhere
_LANE_CAP = 2048                        # max row length (elements) of the canonical copy shape


def _copy_kernel(x_ref, o_ref):
    # Straight tile copy (pure bandwidth op).
    o_ref[...] = x_ref[...]


def _normalize_axis(axis: int, ndim: int) -> int:
    return axis + ndim if axis < 0 else axis


def _out_shape(shape, axis):
    ndim = len(shape)
    total = math.prod(shape) if ndim > 0 else 1
    axis = _normalize_axis(axis, ndim)
    if axis <= 0:
        return (1, total)
    if axis >= ndim:
        return (total, 1)
    m = math.prod(shape[:axis])
    return (m, total // m)


def _canonical_copy_shape(total: int):
    """Lane-dense 2-D factoring (rows, C) of `total` used for the tiled copy."""
    if total % _LANE == 0:
        # Grow C in powers of two (lane-aligned), keeping >= 8 rows when possible.
        c = _LANE
        while total % (2 * c) == 0 and 2 * c <= _LANE_CAP and total // (2 * c) >= 8:
            c *= 2
        return (total // c, c)
    # Not 128-divisible: pick the largest divisor <= _LANE_CAP as the lane dim.
    # This keeps sublane utilization reasonable instead of collapsing to (1, total).
    best_c = 1
    for cand in range(min(_LANE_CAP, total), 0, -1):
        if total % cand == 0:
            best_c = cand
            break
    return (total // best_c, best_c)


def _pick_block(r: int, c: int, itemsize: int):
    """Byte-target block picker; block dims need only be (8,128)-aligned (or
    full extent) — Pallas clips edge blocks via pl.cdiv grids."""
    unit = max(8, 32 // itemsize)             # sublane rows per packed tile: 8 f32, 16 bf16, 32 int8

    # Lane (last-dim) block: multiple of 128, or full extent when c < 128.
    if c >= _LANE:
        max_tn = max(_LANE, (_TARGET_BLOCK_BYTES // itemsize) // _LANE * _LANE)
        tn = min((c // _LANE) * _LANE, max_tn)
    else:
        tn = c

    # Sublane (second-last) block: multiple of `unit`, or full extent when r < unit.
    if r >= unit:
        rows_by_bytes = max(1, _TARGET_BLOCK_BYTES // max(1, tn * itemsize))
        tm = min((r // unit) * unit, max(unit, (rows_by_bytes // unit) * unit))
    else:
        tm = r

    # Guarantee >= 2 blocks whenever possible (2 TensorCores per chip on v7x,
    # megacore sharding along "parallel" axes on v5e/v6e).
    if pl.cdiv(r, tm) * pl.cdiv(c, tn) == 1:
        if r >= 2 * unit:
            tm = max(unit, ((r // 2) // unit) * unit)
        elif c >= 2 * _LANE and tn >= 2 * _LANE:
            tn = max(_LANE, ((tn // 2) // _LANE) * _LANE)
    return tm, tn


def onnx_flatten(x: jax.Array, axis: int = 1) -> jax.Array:
    shape = x.shape
    ndim = len(shape)
    total = math.prod(shape) if ndim > 0 else 1
    out_shape = _out_shape(shape, axis)

    # Zero-size tensors: nothing to copy, pure metadata reshape.
    if total == 0:
        return jnp.reshape(x, out_shape)

    # Free glue: contiguous reinterpretation to the canonical lane-dense shape.
    r, c = _canonical_copy_shape(total)
    x2 = jnp.reshape(x, (r, c))

    itemsize = jnp.dtype(x.dtype).itemsize
    tm, tn = _pick_block(r, c, itemsize)
    grid = (pl.cdiv(r, tm), pl.cdiv(c, tn))

    y = pl.pallas_call(
        _copy_kernel,
        out_shape=jax.ShapeDtypeStruct((r, c), x.dtype),
        grid_spec=pltpu.PrefetchScalarGridSpec(
            num_scalar_prefetch=0,
            grid=grid,
            in_specs=[pl.BlockSpec((tm, tn), lambda i, j: (i, j))],
            out_specs=pl.BlockSpec((tm, tn), lambda i, j: (i, j)),
        ),
        compiler_params=pltpu.CompilerParams(
            dimension_semantics=("parallel", "parallel"),
        ),
        # Pure bandwidth op: read + write of the whole tensor.
        cost_estimate=pl.CostEstimate(
            flops=0, transcendentals=0, bytes_accessed=2 * total * itemsize),
    )(x2)

    # Free glue: contiguous reinterpretation to the semantic 2-D output shape.
    return jnp.reshape(y, out_shape)


def _ref_flatten(x: jax.Array, axis: int) -> jax.Array:
    return jnp.reshape(x, _out_shape(x.shape, axis))


if __name__ == "__main__":
    key = jax.random.PRNGKey(0)
    k0, k1, k2, k3 = jax.random.split(key, 4)

    cases = []
    x_f32 = jax.random.normal(k0, (2, 4, 16, 16), dtype=jnp.float32)   # NCHW
    for axis in (0, 1, 2, 3, 4, -1):
        cases.append((x_f32, axis))
    x_bf16 = jax.random.normal(k1, (2, 4, 16, 16), dtype=jnp.bfloat16)
    cases.append((x_bf16, 1))
    x_odd = jax.random.normal(k2, (3, 5, 7), dtype=jnp.float32)        # unaligned fallback path
    cases.append((x_odd, 2))
    x_big_odd = jax.random.normal(k3, (6, 9, 35), dtype=jnp.float32)   # odd total, divisor factoring
    cases.append((x_big_odd, 1))

    ok = True
    for x, axis in cases:
        out = onnx_flatten(x, axis=axis)
        jax.block_until_ready(out)
        ref = _ref_flatten(x, axis)
        if out.shape != ref.shape or out.dtype != ref.dtype:
            ok = False
        elif not bool(jnp.array_equal(out, ref)):
            ok = False

    if ok:
        print("KERNEL_OK")
    else:
        print("KERNEL_MISMATCH")
</pallas_src>

<mosaic_0001>
module attributes {stable_mosaic.version = 11 : i64} {
  func.func @_copy_kernel(%arg0: i32, %arg1: i32, %arg2: memref<8x128xf32, #tpu.memory_space<vmem>>, %arg3: memref<8x128xf32, #tpu.memory_space<vmem>>) attributes {dimension_semantics = [#tpu.dimension_semantics<parallel>, #tpu.dimension_semantics<parallel>], iteration_bounds = array<i64: 1, 2>, scalar_prefetch = 0 : i64, scratch_operands = 0 : i64, tpu.core_type = #tpu.core_type<tc>, window_params = [{transform_indices = @transform_0, window_bounds = array<i64: 8, 128>}, {transform_indices = @transform_1, window_bounds = array<i64: 8, 128>}]} {
    %c0 = arith.constant 0 : index
    %c0_0 = arith.constant 0 : index
    %0 = vector.load %arg2[%c0, %c0_0] : memref<8x128xf32, #tpu.memory_space<vmem>>, vector<8x128xf32>
    %c0_1 = arith.constant 0 : index
    %c0_2 = arith.constant 0 : index
    %1 = vector.load %arg3[%c0_1, %c0_2] : memref<8x128xf32, #tpu.memory_space<vmem>>, vector<8x128xf32>
    tpu.vector_store %arg3[%c0_1, %c0_2], %0 {strides = array<i32>} : memref<8x128xf32, #tpu.memory_space<vmem>>, vector<8x128xf32>,
    return
  }
  func.func @transform_0(%arg0: i32, %arg1: i32) -> (i32, i32) {
    %c0_i32 = arith.constant 0 : i32
    return %arg0, %arg1 : i32, i32
  }
  func.func @transform_1(%arg0: i32, %arg1: i32) -> (i32, i32) {
    %c0_i32 = arith.constant 0 : i32
    return %arg0, %arg1 : i32, i32
  }
}

</mosaic_0001>

<llo_original>
// kernel: tpu_custom_call.1
$region0: #{tpu_custom_call.1}
  #allocation0 [shape = 'u32[]', space=smem, size = 0x4, offset = 0x4, fixed_abs, tag = 'smem constant byte address 0x4 - core index']
  #allocation1 [shape = 'u32[144,128]{1,0:T(1,128)}', space=vmem, size = 0x12000, scoped, tag = 'internal scratch']
  %s0 = inlined_call_operand.hbm [shape: f32[8,256], index: 0, kind: input, shape index: {}]
  %s1 = inlined_call_operand.hbm [shape: f32[8,256], index: 1, kind: output, shape index: {}]
  %s2 = sld [smem:[#allocation0]]
  $region41: #{tpu_custom_call.1} parent=0
    _
  %s4 = ssub.s32 1, %s2
  %s5 = scalar_select 0, %s4, %s2
  $region1: #{tpu_custom_call.1} parent=0
    #allocation2 [shape = 'u8[8192]{0}', space=vmem, size = 0x2000, scoped, tag = 'input window, operand 0']
    #allocation3 [shape = 's32[2]{0}', space=sflag, size = 0x8, scoped, tag = 'scoped memory for tpu_custom_call.1']
    #allocation4 [shape = 's32[2]{0}', space=sflag, size = 0x8, scoped, tag = 'scoped memory for tpu_custom_call.1']
    #allocation5 [shape = 'u8[8192]{0}', space=vmem, size = 0x2000, scoped, tag = 'output window, operand 0']
    %6 = vsyncpa [#allocation3], 0
    %s7 = scalar_lea.sflag [#allocation3], 1
    %8 = vsyncpa %s7, 0
    %9 = vsyncpa [#allocation4], 0
    %s10 = scalar_lea.sflag [#allocation4], 1
    %11 = vsyncpa %s10, 0
    loop: start=0, step=1, limit=4
    $region2: #{tpu_custom_call.1} parent=1 // loop_pre_header
      _
    $region3: #{tpu_custom_call.1} parent=1 // loop_header
      %s13 = sphi 0, %s17
      %p14 = scmp.ge.s32.totalorder %s13, 4
      %s20 = sphi 0, %s32
      %s21 = sphi 0, %s28
      %s22 = sphi 0, %s20
      %s23 = sphi 0, %s21
      %s24 = sphi 0, %s22
      %s25 = sphi 0, %s23
      %s37 = sphi 0, %s39
      %s40 = sphi 0, %s37
      %s41 = sphi 0, %s40
      %s57 = sphi 0, %s41
      %s65 = sphi 0, %s67
      %s68 = sphi 0, %s65
      %s69 = sphi 0, %s68
      %s85 = sphi 0, %s69
    $region4: #{tpu_custom_call.1} parent=1 // loop_header_branch
      %16 = sbr.rel (%p14) target = $region8
    $region5: #{tpu_custom_call.1} parent=1 // loop_body
      %s18 = ssub.s32 %s13, 1
      %s19 = ssub.s32 %s13, 2
      %s26 = sadd.s32 1, %s21
      %p27 = scmp.ge.s32.totalorder %s26, 2
      %s28 = scalar_select %p27, 0, %s26
      %s29 = sadd.s32 1, %s20
      %s30 = scalar_select %p27, %s29, %s20
      %p31 = scmp.ge.s32.totalorder %s30, 1
      %s32 = scalar_select %p31, 0, %s30
      %s33 = ssub.s32 %s20, %s32
      %s34 = ssub.s32 %s21, %s28
      %s35 = sor.u32 %s33, %s34
      %p36 = scmp.eq.s32.totalorder %s35, 0
      %s38 = sadd.s32 %s37, 1
      %s39 = scalar_select %p36, %s37, %s38
      %p42 = pneg %p36
      %p43 = scmp.eq.s32.totalorder %s13, 1
      %p44 = por %p42, %p43
      %p45 = scmp.ne.s32.totalorder %s37, %s40
      %p46 = scmp.eq.s32.totalorder %s13, 0
      %p47 = por %p45, %p46
      %p48 = scmp.ne.s32.totalorder %s37, %s40
      %p49 = scmp.eq.s32.totalorder %s18, 1
      %p50 = por %p48, %p49
      %p51 = scmp.ne.s32.totalorder %s40, %s41
      %p52 = scmp.eq.s32.totalorder %s18, 0
      %p53 = por %p51, %p52
      %p54 = scmp.ne.s32.totalorder %s40, %s41
      %p55 = scmp.eq.s32.totalorder %s19, 1
      %p56 = por %p54, %p55
      %p58 = scmp.ne.s32.totalorder %s41, %s57
      %p59 = scmp.eq.s32.totalorder %s19, 0
      %p60 = por %p58, %p59
      %s61 = ssub.s32 %s20, %s32
      %s62 = ssub.s32 %s21, %s28
      %s63 = sor.u32 %s61, %s62
      %p64 = scmp.eq.s32.totalorder %s63, 0
      %s66 = sadd.s32 %s65, 1
      %s67 = scalar_select %p64, %s65, %s66
      %p70 = pneg %p64
      %p71 = scmp.eq.s32.totalorder %s13, 1
      %p72 = por %p70, %p71
      %p73 = scmp.ne.s32.totalorder %s65, %s68
      %p74 = scmp.eq.s32.totalorder %s13, 0
      %p75 = por %p73, %p74
      %p76 = scmp.ne.s32.totalorder %s65, %s68
      %p77 = scmp.eq.s32.totalorder %s18, 1
      %p78 = por %p76, %p77
      %p79 = scmp.ne.s32.totalorder %s68, %s69
      %p80 = scmp.eq.s32.totalorder %s18, 0
      %p81 = por %p79, %p80
      %p82 = scmp.ne.s32.totalorder %s68, %s69
      %p83 = scmp.eq.s32.totalorder %s19, 1
      %p84 = por %p82, %p83
      %p86 = scmp.ne.s32.totalorder %s69, %s85
      %p87 = scmp.eq.s32.totalorder %s19, 0
      %p88 = por %p86, %p87
      %p89 = scmp.le.s32.totalorder 1, %s13
      %p90 = scmp.lt.s32.totalorder %s13, 3
      %p91 = pnand %p89, %p90
      %p92 = pneg %p91
      // Predicated region
      $region9: #{tpu_custom_call.1} parent=5 // pred_check
        _
      $region10: #{tpu_custom_call.1} parent=5 // pred_check_branch
        %94 = sbr.rel (%p91) target = $region12
      $region11: #{tpu_custom_call.1} parent=5 // pred_region
        %s95 = ssub.s32 %s13, 1
      $region12: #{tpu_custom_call.1} parent=5 // pred_fallthru
        _
      %p96 = scmp.lt.s32.totalorder %s13, 2
      // Predicated region
      $region13: #{tpu_custom_call.1} parent=5 // pred_check
        %p97 = pneg %p96
      $region14: #{tpu_custom_call.1} parent=5 // pred_check_branch
        %99 = sbr.rel (%p97) target = $region16
      $region15: #{tpu_custom_call.1} parent=5 // pred_region
        // Predicated region
        $region17: #{tpu_custom_call.1} parent=15 // pred_check
          %p100 = pneg %p47
        $region18: #{tpu_custom_call.1} parent=15 // pred_check_branch
          %102 = sbr.rel (%p100) target = $region20
        $region19: #{tpu_custom_call.1} parent=15 // pred_region
          %s103 = sand.u32 %s37, 1
          %s104 = scalar_lea.sflag [#allocation3], %s103
          %s105 = sand.u32 %s37, 1
          %s106 = smul.addr %s105, 8
          %s107 = scalar_lea.vmem [#allocation2], %s106
          %s109 = ssub.s32 128, 128
          %110 = vsyncadd %s104, %s109
          %s111 = smul.addr %s20, 2
          %s112 = sadd.s32 %s21, %s111
          %s113 = smul.addr %s112, 128
          %s114 = scalar_lea.hbm %s0, %s113
          %s116 = sshll.u32 %s107, 4
          %s117 = int_to_ptr.vmem [resolvable:$true] %s116
          %119 = dma.hbm_to_vmem [thread:$0]  %s114, 128, %s117, %s104
        $region20: #{tpu_custom_call.1} parent=15 // pred_fallthru
          _
      $region16: #{tpu_custom_call.1} parent=5 // pred_fallthru
        _
      %p120 = scmp.le.s32.totalorder 1, %s13
      %p121 = scmp.lt.s32.totalorder %s13, 3
      %p122 = pnand %p120, %p121
      %p123 = pneg %p122
      // Predicated region
      $region21: #{tpu_custom_call.1} parent=5 // pred_check
        _
      $region22: #{tpu_custom_call.1} parent=5 // pred_check_branch
        %125 = sbr.rel (%p122) target = $region24
      $region23: #{tpu_custom_call.1} parent=5 // pred_region
        %s126 = ssub.s32 %s13, 1
        %s127 = sand.u32 %s40, 1
        %s128 = scalar_lea.sflag [#allocation3], %s127
        %s129 = sand.u32 %s40, 1
        %s130 = smul.addr %s129, 8
        %s131 = scalar_lea.vmem [#allocation2], %s130
        // Predicated region
        $region25: #{tpu_custom_call.1} parent=23 // pred_check
          %p132 = pneg %p53
        $region26: #{tpu_custom_call.1} parent=23 // pred_check_branch
          %134 = sbr.rel (%p132) target = $region28
        $region27: #{tpu_custom_call.1} parent=23 // pred_region
          %135 = dma.done %s128, 128
        $region28: #{tpu_custom_call.1} parent=23 // pred_fallthru
          _
        %s136 = sand.u32 %s40, 1
        %s137 = scalar_lea.sflag [#allocation3], %s136
        %s138 = sand.u32 %s40, 1
        %s139 = smul.addr %s138, 8
        %s140 = scalar_lea.vmem [#allocation2], %s139
        %p141 = pneg %p53
        %p142 = pneg %p50
        %p143 = pneg %p81
        %p144 = pneg %p78
        %s145 = sand.u32 %s68, 1
        %s146 = scalar_lea.sflag [#allocation4], %s145
        %s147 = sand.u32 %s68, 1
        %s148 = smul.addr %s147, 8
        %s149 = scalar_lea.vmem [#allocation5], %s148
        %v150 = vld [vmem:[%s131] sm:$0xff]
        %151 = vst [vmem:[%s149] sm:$0xff] %v150
        %s152 = sand.u32 %s68, 1
        %s153 = scalar_lea.sflag [#allocation4], %s152
        %s154 = sand.u32 %s68, 1
        %s155 = smul.addr %s154, 8
        %s156 = scalar_lea.vmem [#allocation5], %s155
        // Predicated region
        $region29: #{tpu_custom_call.1} parent=23 // pred_check
          %p157 = pneg %p78
        $region30: #{tpu_custom_call.1} parent=23 // pred_check_branch
          %159 = sbr.rel (%p157) target = $region32
        $region31: #{tpu_custom_call.1} parent=23 // pred_region
          %s161 = ssub.s32 128, 128
          %162 = vsyncadd %s153, %s161
          %s163 = smul.addr %s22, 2
          %s164 = sadd.s32 %s23, %s163
          %s165 = smul.addr %s164, 128
          %s166 = scalar_lea.hbm %s1, %s165
          %s168 = sshll.u32 %s156, 4
          %s169 = int_to_ptr.vmem [resolvable:$true] %s168
          %171 = dma.vmem_to_hbm [thread:$0]  %s169, 128, %s166, %s153
        $region32: #{tpu_custom_call.1} parent=23 // pred_fallthru
          _
      $region24: #{tpu_custom_call.1} parent=5 // pred_fallthru
        _
      %p172 = scmp.le.s32.totalorder 2, %s13
      // Predicated region
      $region33: #{tpu_custom_call.1} parent=5 // pred_check
        %p173 = pneg %p172
      $region34: #{tpu_custom_call.1} parent=5 // pred_check_branch
        %175 = sbr.rel (%p173) target = $region36
      $region35: #{tpu_custom_call.1} parent=5 // pred_region
        %s176 = ssub.s32 %s13, 2
        // Predicated region
        $region37: #{tpu_custom_call.1} parent=35 // pred_check
          %p177 = pneg %p84
        $region38: #{tpu_custom_call.1} parent=35 // pred_check_branch
          %179 = sbr.rel (%p177) target = $region40
        $region39: #{tpu_custom_call.1} parent=35 // pred_region
          %s180 = sand.u32 %s69, 1
          %s181 = scalar_lea.sflag [#allocation4], %s180
          %s182 = sand.u32 %s69, 1
          %s183 = smul.addr %s182, 8
          %s184 = scalar_lea.vmem [#allocation5], %s183
          %185 = dma.done %s181, 128
        $region40: #{tpu_custom_call.1} parent=35 // pred_fallthru
          _
      $region36: #{tpu_custom_call.1} parent=5 // pred_fallthru
        _
    $region6: #{tpu_custom_call.1} parent=1 // loop_footer
      %s17 = sadd.s32 1, %s13
    $region7: #{tpu_custom_call.1} parent=1 // loop_footer_branch
      %12 = sbr.rel target = $region3
    $region8: #{tpu_custom_call.1} parent=1 // loop_exit
      _
    %186 = vsyncpa [#allocation3], 1
    %s187 = scalar_lea.sflag [#allocation3], 1
    %188 = vsyncpa %s187, 1
    %189 = vsyncpa [#allocation4], 1
    %s190 = scalar_lea.sflag [#allocation4], 1
    %191 = vsyncpa %s190, 1

</llo_original>
